<compile_context>
chip_gen: v7x
topology: tpu7x:2x2x1
jax: 0.10.0
libtpu: 0.0.40
codegen_flags: <defaults>
</compile_context>

<pallas_src>
import functools
import math

import jax
import jax.numpy as jnp
from jax.experimental import pallas as pl
from jax.experimental.pallas import tpu as pltpu


_VMEM_LIMIT_BYTES = 48 * 1024 * 1024  # <= v7x physical VMEM (64 MiB) with headroom


def _round_up(a, b):
    return (a + b - 1) // b * b


# ---------------------------------------------------------------------------
# Tiled linear:  out = x @ w + b        x: (M, K), w: (K, N), b: (N,)
# ---------------------------------------------------------------------------
def _linear_kernel_single_k(x_ref, w_ref, b_ref, o_ref):
    # Whole K in one step: no accumulator scratch, single write per output tile.
    o_ref[...] = (jnp.dot(x_ref[...], w_ref[...],
                          preferred_element_type=jnp.float32)
                  + b_ref[...]).astype(o_ref.dtype)


def _linear_kernel_multi_k(x_ref, w_ref, b_ref, o_ref, acc_ref):
    # grid = (M tiles, N tiles, K tiles); K is the innermost reduction axis.
    @pl.when(pl.program_id(2) == 0)
    def _():
        acc_ref[...] = jnp.zeros_like(acc_ref[...])

    acc_ref[...] += jnp.dot(x_ref[...], w_ref[...],
                            preferred_element_type=jnp.float32)

    @pl.when(pl.program_id(2) == pl.num_programs(2) - 1)
    def _():
        o_ref[...] = (acc_ref[...] + b_ref[...]).astype(o_ref.dtype)


def linear(x2d, w, b, *, out_dtype, tm=512, tn=1024, tk=1024, max_single_k=2048):
    """x2d: (M, K); w: (K, N) (already transposed vs. torch nn.Linear); b: (N,)."""
    M, K = x2d.shape
    Kw, N = w.shape
    assert K == Kw

    # MXU-aligned tiles, clamped to the (padded) problem size for small shapes.
    tm = min(tm, _round_up(M, 8))
    tn = min(tn, _round_up(N, 128))
    kp_full = _round_up(K, 128)
    single_k = kp_full <= max_single_k
    tk = kp_full if single_k else min(tk, kp_full)

    Mp, Kp, Np = _round_up(M, tm), _round_up(K, tk), _round_up(N, tn)

    xp = jnp.pad(x2d, ((0, Mp - M), (0, Kp - K)))
    wp = jnp.pad(w, ((0, Kp - K), (0, Np - N)))
    bp = jnp.pad(b.reshape(1, -1).astype(jnp.float32), ((0, 0), (0, Np - N)))

    if single_k:
        out = pl.pallas_call(
            _linear_kernel_single_k,
            out_shape=jax.ShapeDtypeStruct((Mp, Np), out_dtype),
            grid_spec=pltpu.PrefetchScalarGridSpec(
                num_scalar_prefetch=0,
                grid=(Mp // tm, Np // tn),
                in_specs=[
                    pl.BlockSpec((tm, Kp), lambda i, j: (i, 0)),   # x tile
                    pl.BlockSpec((Kp, tn), lambda i, j: (0, j)),   # w tile
                    pl.BlockSpec((1, tn), lambda i, j: (0, j)),    # bias (f32)
                ],
                out_specs=pl.BlockSpec((tm, tn), lambda i, j: (i, j)),
            ),
            compiler_params=pltpu.CompilerParams(
                dimension_semantics=("parallel", "parallel"),
                vmem_limit_bytes=_VMEM_LIMIT_BYTES),
        )(xp, wp, bp)
    else:
        out = pl.pallas_call(
            _linear_kernel_multi_k,
            out_shape=jax.ShapeDtypeStruct((Mp, Np), out_dtype),
            grid_spec=pltpu.PrefetchScalarGridSpec(
                num_scalar_prefetch=0,
                grid=(Mp // tm, Np // tn, Kp // tk),
                in_specs=[
                    pl.BlockSpec((tm, tk), lambda i, j, k: (i, k)),
                    pl.BlockSpec((tk, tn), lambda i, j, k: (k, j)),
                    pl.BlockSpec((1, tn), lambda i, j, k: (0, j)),
                ],
                out_specs=pl.BlockSpec((tm, tn), lambda i, j, k: (i, j)),
                scratch_shapes=[pltpu.VMEM((tm, tn), jnp.float32)],
            ),
            compiler_params=pltpu.CompilerParams(
                dimension_semantics=("parallel", "parallel", "arbitrary"),
                vmem_limit_bytes=_VMEM_LIMIT_BYTES),
        )(xp, wp, bp)
    return out[:M, :N]


# ---------------------------------------------------------------------------
# Flash attention (non-causal) reading q/k/v directly from the fused QKV slab.
# qkv layout: (B, Lpad, 3*H*Dp) with feature order (3, H, Dp); Dp = padded head dim.
# ---------------------------------------------------------------------------
def _flash_kernel(q_ref, k_ref, v_ref, bias_ref, o_ref, m_sc, l_sc, acc_sc,
                  *, scale, use_mask):
    kv = pl.program_id(3)

    @pl.when(kv == 0)
    def _():
        m_sc[...] = jnp.full_like(m_sc[...], -jnp.inf)
        l_sc[...] = jnp.zeros_like(l_sc[...])
        acc_sc[...] = jnp.zeros_like(acc_sc[...])

    q = q_ref[0] * scale                           # fold softmax scale into q
    k = k_ref[0]
    s = jax.lax.dot_general(q, k, (((1,), (1,)), ((), ())),
                            preferred_element_type=jnp.float32)
    if use_mask:
        # (1, tkv) additive bias: 0 on real keys, -1e30 on zero-padded keys.
        s = s + bias_ref[...]

    m_new = jnp.maximum(m_sc[...], s.max(axis=-1, keepdims=True))
    alpha = jnp.exp(m_sc[...] - m_new)
    p = jnp.exp(s - m_new)
    l_sc[...] = alpha * l_sc[...] + p.sum(axis=-1, keepdims=True)
    acc_sc[...] = alpha * acc_sc[...] + jnp.dot(
        p.astype(v_ref.dtype), v_ref[0], preferred_element_type=jnp.float32)
    m_sc[...] = m_new

    @pl.when(kv == pl.num_programs(3) - 1)
    def _():
        o_ref[0] = (acc_sc[...] * pl.reciprocal(l_sc[...], approx=True)
                    ).astype(o_ref.dtype)


def flash_attention_fused(qkv2d, B, L, H, d, *, tq_default=256, tkv_default=512):
    """qkv2d: (B*L, 3*H*d) output of the QKV projection. Returns (B, L, H*d)."""
    scale = 1.0 / math.sqrt(d)
    Dp = _round_up(max(d, 128), 128)        # lane-dense head dim

    if L <= tq_default:
        tq = tkv = _round_up(L, 8)          # single tile along both q and kv
    else:
        tq, tkv = tq_default, tkv_default   # tkv is a multiple of tq
    Lpad = _round_up(L, max(tq, tkv))
    needs_mask = Lpad != L

    qkv5 = qkv2d.reshape(B, L, 3, H, d)
    qkv5 = jnp.pad(qkv5, ((0, 0), (0, Lpad - L), (0, 0), (0, 0), (0, Dp - d)))
    qkv_flat = qkv5.reshape(B, Lpad, 3 * H * Dp)

    # Precomputed key-padding bias row (only read when needs_mask).
    col = jnp.arange(Lpad, dtype=jnp.int32)
    bias = jnp.where(col < L, 0.0, -1e30).astype(jnp.float32).reshape(1, Lpad)

    kernel = functools.partial(_flash_kernel, scale=scale, use_mask=needs_mask)

    out = pl.pallas_call(
        kernel,
        out_shape=jax.ShapeDtypeStruct((B, Lpad, H * Dp), qkv2d.dtype),
        grid_spec=pltpu.PrefetchScalarGridSpec(
            num_scalar_prefetch=0,
            grid=(B, H, Lpad // tq, Lpad // tkv),
            in_specs=[
                # q / k / v are different feature-blocks of the same qkv slab.
                pl.BlockSpec((1, tq, Dp), lambda b, h, i, j: (b, i, h)),
                pl.BlockSpec((1, tkv, Dp), lambda b, h, i, j: (b, j, H + h)),
                pl.BlockSpec((1, tkv, Dp), lambda b, h, i, j: (b, j, 2 * H + h)),
                pl.BlockSpec((1, tkv), lambda b, h, i, j: (0, j)),
            ],
            out_specs=pl.BlockSpec((1, tq, Dp), lambda b, h, i, j: (b, i, h)),
            scratch_shapes=[
                pltpu.VMEM((tq, 1), jnp.float32),    # running max
                pltpu.VMEM((tq, 1), jnp.float32),    # running denom
                pltpu.VMEM((tq, Dp), jnp.float32),   # output accumulator
            ],
        ),
        compiler_params=pltpu.CompilerParams(
            dimension_semantics=("parallel", "parallel", "parallel", "arbitrary"),
            vmem_limit_bytes=_VMEM_LIMIT_BYTES),
    )(qkv_flat, qkv_flat, qkv_flat, bias)

    if Dp == d:
        return out[:, :L, :]
    return out.reshape(B, Lpad, H, Dp)[:, :L, :, :d].reshape(B, L, H * d)


# ---------------------------------------------------------------------------
# Full SelfAttention forward (eval mode: dropout p = 0, causal = False)
# ---------------------------------------------------------------------------
def self_attention(x, wqkv, bqkv, wproj, bproj, num_heads,
                   *, compute_dtype=jnp.bfloat16):
    """x: (B, L, C). Weights stored as (in, out); biases as (out,)."""
    B, L, C = x.shape
    assert C % num_heads == 0
    d = C // num_heads
    cd = compute_dtype

    x2d = x.reshape(B * L, C).astype(cd)

    # QKV projection (bf16 operands, f32 accumulation).
    qkv = linear(x2d, wqkv.astype(cd), bqkv, out_dtype=cd)          # (B*L, 3C)

    # Attention directly on the fused QKV slab — no head-split transposes.
    o = flash_attention_fused(qkv, B, L, num_heads, d)              # (B, L, C)

    out = linear(o.reshape(B * L, C), wproj.astype(cd), bproj,
                 out_dtype=x.dtype)                                  # (B*L, C)
    # TODO(synk): attn_dropout / proj_dropout are training-only (p=0 at eval) and
    # causal masking (module default causal=False) is not implemented here.
    return out.reshape(B, L, C)


if __name__ == "__main__":
    B, L, C, H = 2, 8, 32, 4
    key = jax.random.PRNGKey(0)
    kx, k1, k2, k3, k4 = jax.random.split(key, 5)

    x = jax.random.normal(kx, (B, L, C), jnp.float32)
    s1 = 1.0 / math.sqrt(C)
    wqkv = jax.random.uniform(k1, (C, 3 * C), jnp.float32, -s1, s1)
    bqkv = jax.random.uniform(k2, (3 * C,), jnp.float32, -s1, s1)
    wproj = jax.random.uniform(k3, (C, C), jnp.float32, -s1, s1)
    bproj = jax.random.uniform(k4, (C,), jnp.float32, -s1, s1)

    out = self_attention(x, wqkv, bqkv, wproj, bproj, H)
    jax.block_until_ready(out)

    # f32 reference (same math as the PyTorch module in eval mode).
    d = C // H
    qkv_r = (x @ wqkv + bqkv).reshape(B, L, 3, H, d)
    q_r = jnp.transpose(qkv_r[:, :, 0], (0, 2, 1, 3))
    k_r = jnp.transpose(qkv_r[:, :, 1], (0, 2, 1, 3))
    v_r = jnp.transpose(qkv_r[:, :, 2], (0, 2, 1, 3))
    s = jnp.einsum("bhqd,bhkd->bhqk", q_r, k_r) / math.sqrt(d)
    p = jax.nn.softmax(s, axis=-1)
    o_r = jnp.einsum("bhqk,bhkd->bhqd", p, v_r)
    ref = jnp.transpose(o_r, (0, 2, 1, 3)).reshape(B, L, C) @ wproj + bproj

    assert out.shape == (B, L, C)
    max_err = float(jnp.max(jnp.abs(out - ref)))
    assert max_err < 5e-2, f"mismatch vs reference: max abs err {max_err}"
    print("KERNEL_OK")
</pallas_src>

<mosaic_0001>
module attributes {stable_mosaic.version = 11 : i64} {
  func.func @_linear_kernel_single_k(%arg0: i32, %arg1: i32, %arg2: memref<16x128xbf16, #tpu.memory_space<vmem>>, %arg3: memref<128x128xbf16, #tpu.memory_space<vmem>>, %arg4: memref<1x128xf32, #tpu.memory_space<vmem>>, %arg5: memref<16x128xbf16, #tpu.memory_space<vmem>>) attributes {dimension_semantics = [#tpu.dimension_semantics<parallel>, #tpu.dimension_semantics<parallel>], iteration_bounds = array<i64: 1, 1>, scalar_prefetch = 0 : i64, scratch_operands = 0 : i64, tpu.core_type = #tpu.core_type<tc>, window_params = [{transform_indices = @transform_0, window_bounds = array<i64: 16, 128>}, {transform_indices = @transform_1, window_bounds = array<i64: 128, 128>}, {transform_indices = @transform_2, window_bounds = array<i64: 1, 128>}, {transform_indices = @transform_3, window_bounds = array<i64: 16, 128>}]} {
    %c0 = arith.constant 0 : index
    %c0_0 = arith.constant 0 : index
    %0 = vector.load %arg2[%c0, %c0_0] : memref<16x128xbf16, #tpu.memory_space<vmem>>, vector<16x128xbf16>
    %c0_1 = arith.constant 0 : index
    %c0_2 = arith.constant 0 : index
    %1 = vector.load %arg3[%c0_1, %c0_2] : memref<128x128xbf16, #tpu.memory_space<vmem>>, vector<128x128xbf16>
    %cst = arith.constant dense<0.000000e+00> : vector<16x128xf32>
    %2 = tpu.matmul %0, %1, %cst {dimension_numbers = #tpu.dot_dimension_numbers<[1], [0], [0], [1], [0, 0, 1, 1], [], []>} : vector<16x128xbf16>, vector<128x128xbf16>, vector<16x128xf32> -> vector<16x128xf32>
    %c0_3 = arith.constant 0 : index
    %c0_4 = arith.constant 0 : index
    %3 = vector.load %arg4[%c0_3, %c0_4] : memref<1x128xf32, #tpu.memory_space<vmem>>, vector<1x128xf32>
    %4 = vector.broadcast %3 : vector<1x128xf32> to vector<16x128xf32>
    %5 = arith.addf %2, %4 : vector<16x128xf32>
    %6 = arith.truncf %5 : vector<16x128xf32> to vector<16x128xbf16>
    %c0_5 = arith.constant 0 : index
    %c0_6 = arith.constant 0 : index
    %7 = vector.load %arg5[%c0_5, %c0_6] : memref<16x128xbf16, #tpu.memory_space<vmem>>, vector<16x128xbf16>
    tpu.vector_store %arg5[%c0_5, %c0_6], %6 {strides = array<i32>} : memref<16x128xbf16, #tpu.memory_space<vmem>>, vector<16x128xbf16>,
    return
  }
  func.func @transform_0(%arg0: i32, %arg1: i32) -> (i32, i32) {
    %c0_i32 = arith.constant 0 : i32
    %c0_i32_0 = arith.constant 0 : i32
    return %arg0, %c0_i32 : i32, i32
  }
  func.func @transform_1(%arg0: i32, %arg1: i32) -> (i32, i32) {
    %c0_i32 = arith.constant 0 : i32
    %c0_i32_0 = arith.constant 0 : i32
    return %c0_i32, %arg1 : i32, i32
  }
  func.func @transform_2(%arg0: i32, %arg1: i32) -> (i32, i32) {
    %c0_i32 = arith.constant 0 : i32
    %c0_i32_0 = arith.constant 0 : i32
    return %c0_i32, %arg1 : i32, i32
  }
  func.func @transform_3(%arg0: i32, %arg1: i32) -> (i32, i32) {
    %c0_i32 = arith.constant 0 : i32
    return %arg0, %arg1 : i32, i32
  }
}

</mosaic_0001>

<llo_original>
// kernel: tpu_custom_call.1
$region0: #{tpu_custom_call.1}
  #allocation0 [shape = 'u32[]', space=smem, size = 0x4, offset = 0x4, fixed_abs, tag = 'smem constant byte address 0x4 - core index']
  #allocation1 [shape = 'u32[144,128]{1,0:T(1,128)}', space=vmem, size = 0x12000, scoped, tag = 'internal scratch']
  %s0 = inlined_call_operand.hbm [shape: bf16[16,128], index: 0, kind: input, shape index: {}]
  %s1 = inlined_call_operand.hbm [shape: bf16[128,128], index: 1, kind: input, shape index: {}]
  %s2 = inlined_call_operand.vmem [shape: f32[1,128], index: 2, kind: input, shape index: {}]
  %s3 = inlined_call_operand.hbm [shape: bf16[16,128], index: 3, kind: output, shape index: {}]
  %s4 = sld [smem:[#allocation0]]
  $region30: #{tpu_custom_call.1} parent=0
    _
  %s6 = ssub.s32 1, %s4
  %s7 = scalar_select 0, %s6, %s4
  $region1: #{tpu_custom_call.1} parent=0
    #allocation2 [shape = 'u8[4096]{0}', space=vmem, size = 0x1000, scoped, tag = 'input window, operand 0, single buffered']
    #allocation3 [shape = 's32[1]{0}', space=sflag, size = 0x4, scoped, tag = 'scoped memory for tpu_custom_call.1']
    #allocation4 [shape = 's32[1]{0}', space=sflag, size = 0x4, scoped, tag = 'scoped memory for tpu_custom_call.1']
    #allocation5 [shape = 'u8[32768]{0}', space=vmem, size = 0x8000, scoped, tag = 'input window, operand 1, single buffered']
    #allocation6 [shape = 's32[1]{0}', space=sflag, size = 0x4, scoped, tag = 'scoped memory for tpu_custom_call.1']
    #allocation7 [shape = 'u8[4096]{0}', space=vmem, size = 0x1000, scoped, tag = 'output window, operand 0, single buffered']
    %8 = vsyncpa [#allocation3], 0
    %9 = vsyncpa [#allocation6], 0
    %10 = vsyncpa [#allocation4], 0
    // Predicated region
    $region2: #{tpu_custom_call.1} parent=1 // pred_check
      _
    $region3: #{tpu_custom_call.1} parent=1 // pred_check_branch
      %12 = sbr.rel (0) target = $region5
    $region4: #{tpu_custom_call.1} parent=1 // pred_region
      %s14 = ssub.s32 128, 128
      %15 = vsyncadd [#allocation3], %s14
      %s16 = sshll.u32 [#allocation2], 4
      %s17 = int_to_ptr.vmem [resolvable:$true] %s16
      %22 = dma.hbm_to_vmem [thread:$0]  %s0, 128, %s17, [#allocation3], 64, 64, 4
    $region5: #{tpu_custom_call.1} parent=1 // pred_fallthru
      _
    // Predicated region
    $region6: #{tpu_custom_call.1} parent=1 // pred_check
      _
    $region7: #{tpu_custom_call.1} parent=1 // pred_check_branch
      %24 = sbr.rel (0) target = $region9
    $region8: #{tpu_custom_call.1} parent=1 // pred_region
      %s26 = ssub.s32 1024, 1024
      %27 = vsyncadd [#allocation6], %s26
      %s28 = sshll.u32 [#allocation5], 4
      %s29 = int_to_ptr.vmem [resolvable:$true] %s28
      %34 = dma.hbm_to_vmem [thread:$0]  %s1, 1024, %s29, [#allocation6], 64, 64, 4
    $region9: #{tpu_custom_call.1} parent=1 // pred_fallthru
      _
    // Predicated region
    $region10: #{tpu_custom_call.1} parent=1 // pred_check
      _
    $region11: #{tpu_custom_call.1} parent=1 // pred_check_branch
      %36 = sbr.rel (0) target = $region13
    $region12: #{tpu_custom_call.1} parent=1 // pred_region
      _
    $region13: #{tpu_custom_call.1} parent=1 // pred_fallthru
      _
    // Predicated region
    $region14: #{tpu_custom_call.1} parent=1 // pred_check
      _
    $region15: #{tpu_custom_call.1} parent=1 // pred_check_branch
      %38 = sbr.rel (0) target = $region17
    $region16: #{tpu_custom_call.1} parent=1 // pred_region
      %39 = dma.done [#allocation3], 128
    $region17: #{tpu_custom_call.1} parent=1 // pred_fallthru
      _
    // Predicated region
    $region18: #{tpu_custom_call.1} parent=1 // pred_check
      _
    $region19: #{tpu_custom_call.1} parent=1 // pred_check_branch
      %41 = sbr.rel (0) target = $region21
    $region20: #{tpu_custom_call.1} parent=1 // pred_region
      %42 = dma.done [#allocation6], 1024
    $region21: #{tpu_custom_call.1} parent=1 // pred_fallthru
      _
    %v44 = vld [vmem:[#allocation2] sm:$0xf]
    %v45 = vld [vmem:[#allocation2 + $0x4] sm:$0xf]
    %v46 = vld [vmem:[#allocation5] sm:$0xf]
    %v47 = vld [vmem:[#allocation5 + $0x4] sm:$0xf]
    %v48 = vld [vmem:[#allocation5 + $0x8] sm:$0xf]
    %v49 = vld [vmem:[#allocation5 + $0xc] sm:$0xf]
    %v50 = vld [vmem:[#allocation5 + $0x10] sm:$0xf]
    %v51 = vld [vmem:[#allocation5 + $0x14] sm:$0xf]
    %v52 = vld [vmem:[#allocation5 + $0x18] sm:$0xf]
    %v53 = vld [vmem:[#allocation5 + $0x1c] sm:$0xf]
    %v54 = vld [vmem:[#allocation5 + $0x20] sm:$0xf]
    %v55 = vld [vmem:[#allocation5 + $0x24] sm:$0xf]
    %v56 = vld [vmem:[#allocation5 + $0x28] sm:$0xf]
    %v57 = vld [vmem:[#allocation5 + $0x2c] sm:$0xf]
    %v58 = vld [vmem:[#allocation5 + $0x30] sm:$0xf]
    %v59 = vld [vmem:[#allocation5 + $0x34] sm:$0xf]
    %v60 = vld [vmem:[#allocation5 + $0x38] sm:$0xf]
    %v61 = vld [vmem:[#allocation5 + $0x3c] sm:$0xf]
    %v62 = vld [vmem:[%s2] sm:$0x1]
    %v64 = vlaneseq
    %v65 = vshrl.u32 %v64, 7
    %v66 = vsub.s32 0, %v65
    %v67 = vrot.slane %v62, %v66
    %v71 = vunpack.c.l.b16 %v44
    %v72 = vunpack.c.l.b16 %v45
    %v73 = vpack.c.b16 %v72, %v71
    %v91 = vunpack.c.l.b16 %v46
    %v92 = vunpack.c.l.b16 %v47
    %v93 = vunpack.c.l.b16 %v48
    %v94 = vunpack.c.l.b16 %v49
    %v95 = vunpack.c.l.b16 %v50
    %v96 = vunpack.c.l.b16 %v51
    %v97 = vunpack.c.l.b16 %v52
    %v98 = vunpack.c.l.b16 %v53
    %v99 = vunpack.c.l.b16 %v54
    %v100 = vunpack.c.l.b16 %v55
    %v101 = vunpack.c.l.b16 %v56
    %v102 = vunpack.c.l.b16 %v57
    %v103 = vunpack.c.l.b16 %v58
    %v104 = vunpack.c.l.b16 %v59
    %v105 = vunpack.c.l.b16 %v60
    %v106 = vunpack.c.l.b16 %v61
    %v107 = vpack.c.b16 %v92, %v91
    %v108 = vpack.c.b16 %v94, %v93
    %v109 = vpack.c.b16 %v96, %v95
    %v110 = vpack.c.b16 %v98, %v97
    %v111 = vpack.c.b16 %v100, %v99
    %v112 = vpack.c.b16 %v102, %v101
    %v113 = vpack.c.b16 %v104, %v103
    %v114 = vpack.c.b16 %v106, %v105
    %123 = vmatprep.subr.bf16.mxu0 0
    %124 = vmatpush1.bf16.msra.mxu0 %v107
    %125 = vmatprep.subr.bf16.mxu0 0
    %126 = vmatpush1.bf16.msra.mxu0 %v108
    %127 = vmatprep.subr.bf16.mxu0 0
    %128 = vmatpush1.bf16.msra.mxu0 %v109
    %129 = vmatprep.subr.bf16.mxu0 0
    %130 = vmatpush1.bf16.msra.mxu0 %v110
    %131 = vmatprep.subr.bf16.mxu0 0
    %132 = vmatpush1.bf16.msra.mxu0 %v111
    %133 = vmatprep.subr.bf16.mxu0 0
    %134 = vmatpush1.bf16.msra.mxu0 %v112
    %135 = vmatprep.subr.bf16.mxu0 0
    %136 = vmatpush1.bf16.msra.mxu0 %v113
    %137 = vmatprep.subr.bf16.mxu0 0
    %138 = vmatpush1.bf16.msra.mxu0 %v114
    %139 = vmatprep.subr.bf16.mxu0 0
    %140 = vmatpush1.bf16.msra.mxu0 0
    %141 = vmatprep.subr.bf16.mxu0 0
    %142 = vmatpush1.bf16.msra.mxu0 0
    %143 = vmatprep.subr.bf16.mxu0 0
    %144 = vmatpush1.bf16.msra.mxu0 0
    %145 = vmatprep.subr.bf16.mxu0 0
    %146 = vmatpush1.bf16.msra.mxu0 0
    %147 = vmatprep.subr.bf16.mxu0 0
    %148 = vmatpush1.bf16.msra.mxu0 0
    %149 = vmatprep.subr.bf16.mxu0 0
    %150 = vmatpush1.bf16.msra.mxu0 0
    %151 = vmatprep.subr.bf16.mxu0 0
    %152 = vmatpush1.bf16.msra.mxu0 0
    %153 = vmatprep.subr.bf16.mxu0 0
    %154 = vmatpush1.bf16.msra.mxu0 0
    %155 = vmatprep.mubr.bf16.mxu0 0
    %156 = vmatmul.mubr.bf16.gmra.mrb[0].mxu0 %v73
    %v157 = vpop.f32.mrb[0].mxu0
    %v158 = vadd.f32 %v67, %v157
    %v159 = vpop.f32.mrb[0].mxu0
    %v160 = vpop.f32.mrb[0].mxu0
    %v161 = vadd.f32 %v67, %v160
    %v162 = vpop.f32.mrb[0].mxu0
    %163 = vdwg.mxu0
    %v164 = vpack.c.bf16 %v161, %v158
    %v166 = vunpack.c.l.b16 %v164
    %v167 = vunpack.c.h.b16 %v164
    %v168 = vpack.c.b16 %v166, %v166
    %v169 = vpack.c.b16 %v167, %v167
    %172 = vst [vmem:[#allocation7] sm:$0xf] %v168
    %173 = vst [vmem:[#allocation7 + $0x4] sm:$0xf] %v169
    // Predicated region
    $region22: #{tpu_custom_call.1} parent=1 // pred_check
      _
    $region23: #{tpu_custom_call.1} parent=1 // pred_check_branch
      %175 = sbr.rel (0) target = $region25
    $region24: #{tpu_custom_call.1} parent=1 // pred_region
      %s177 = ssub.s32 128, 128
      %178 = vsyncadd [#allocation4], %s177
      %s179 = sshll.u32 [#allocation7], 4
      %s180 = int_to_ptr.vmem [resolvable:$true] %s179
      %185 = dma.vmem_to_hbm [thread:$0]  %s180, 128, %s3, [#allocation4], 64, 64, 4
    $region25: #{tpu_custom_call.1} parent=1 // pred_fallthru
      _
    // Predicated region
    $region26: #{tpu_custom_call.1} parent=1 // pred_check
      _
    $region27: #{tpu_custom_call.1} parent=1 // pred_check_branch
      %187 = sbr.rel (0) target = $region29
    $region28: #{tpu_custom_call.1} parent=1 // pred_region
      %188 = dma.done [#allocation4], 128
    $region29: #{tpu_custom_call.1} parent=1 // pred_fallthru
      _
    %189 = vsyncpa [#allocation3], 1
    %190 = vsyncpa [#allocation6], 1
    %191 = vsyncpa [#allocation4], 1

</llo_original>
